<compile_context>
chip_gen: v5e
topology: v5e:2x2
jax: 0.10.0
libtpu: 0.0.40
codegen_flags: <defaults>
</compile_context>

<pallas_src>
import math

import jax
import jax.numpy as jnp
from jax.experimental import pallas as pl
from jax.experimental.pallas import tpu as pltpu

_LANE = 128


def _drop_path_kernel(scale_ref, x_ref, o_ref):
    # scale_ref: (TR, 1) float32 per-row scale (0 or 1/keep_prob)
    # x_ref / o_ref: (TR, TF) tiles of the flattened activation.
    # Multiply in f32 (no-op for f32 inputs; avoids bf16 rounding of
    # 1/keep_prob).  This kernel is purely HBM-bandwidth bound, so the extra
    # VALU/cast work is hidden under the DMAs.
    x = x_ref[...].astype(jnp.float32)
    o_ref[...] = (x * scale_ref[...]).astype(o_ref.dtype)


def _tile_budget():
    """Per-generation tile size + scoped-VMEM limit.

    Two HBM streams (x read, out write), each double-buffered by the BlockSpec
    pipeline -> ~4 * target_bytes of scoped VMEM.  4 MiB tiles keep the fixed
    ~0.35 us per-grid-step overhead in the noise even at v7x HBM speeds, and
    16 MiB of scoped VMEM fits every generation once we raise v5e's 16 MiB
    default scoped limit.
    """
    try:
        vmem_bytes = int(pltpu.get_tpu_info().vmem_capacity_bytes)
    except Exception:  # info query unavailable -> assume smallest (v7x) VMEM
        vmem_bytes = 64 << 20
    target_bytes = 4 << 20
    vmem_limit = min(vmem_bytes // 2, 48 << 20)
    return target_bytes, vmem_limit


def drop_path(x, drop_prob: float = 0.0, training: bool = False, *, key=None,
              donate_x: bool = False):
    """JAX/Pallas equivalent of torch drop_path: per-sample binary keep mask,
    surviving samples scaled by 1/keep_prob.

    Set donate_x=True only if the caller actually donates x's buffer; it
    aliases x to the output (halves peak HBM footprint, no extra copy)."""
    if drop_prob == 0.0 or not training:
        return x
    if not (0.0 < drop_prob < 1.0):
        raise ValueError(f"drop_prob must be in [0, 1), got {drop_prob}")
    if key is None:
        raise ValueError("drop_path requires an explicit PRNG key when training")
    keep_prob = 1.0 - drop_prob

    B = x.shape[0]
    F = math.prod(x.shape[1:]) if x.ndim > 1 else 1
    itemsize = jnp.dtype(x.dtype).itemsize

    # Per-sample keep mask + scale, computed in float32 (correctness hardening
    # for bf16 inputs; tiny glue, the hot path is the kernel).
    u = jax.random.uniform(key, (B, 1), dtype=jnp.float32)
    scale = jnp.floor(keep_prob + u) * (1.0 / keep_prob)  # (B, 1) f32, {0, 1/kp}

    # ---- layout: lane-dense 2-D slab with sublanes filled -------------------
    # Sub-32-bit dtypes pack along sublanes; a block with fewer rows than
    # `row_align` is physically padded in VMEM (wasting DMA/vst throughput and
    # breaking the VMEM budget math).  When B is small, split each sample's
    # features across R rows (free reshape) and repeat the scale R times.
    row_align = {4: 8, 2: 16, 1: 32}.get(itemsize, 8)
    R = 1
    if B < row_align and F > 1:
        want = -(-row_align // B)  # rows-per-sample needed to fill sublanes
        for cand in range(want, min(F, 8 * want) + 1):
            if F % cand == 0:
                R = cand
                break
    rows, F_eff = B * R, F // R
    x2d = x.reshape(rows, F_eff)
    scale_rows = jnp.repeat(scale, R, axis=0) if R > 1 else scale

    # ---- tiling: no pad / no slice; Pallas masks the ragged boundary --------
    target_bytes, vmem_limit = _tile_budget()
    TR = rows if rows <= row_align else row_align
    padded_rows = max(TR, row_align)  # physical sublane footprint of one block
    tf_budget = max(_LANE, (target_bytes // (padded_rows * itemsize)) // _LANE * _LANE)
    if F_eff <= tf_budget:
        TF = F_eff          # single full-width block (allowed even if %128 != 0)
    else:
        TF = tf_budget      # multiple of 128; only the last j block is masked

    grid = (pl.cdiv(rows, TR), pl.cdiv(F_eff, TF))

    # TODO(synk): for large drop_prob, a manual make_async_copy pipeline gated
    # by @pl.when(keep) could skip reading dropped samples' tiles entirely
    # (~drop_prob of the read stream); BlockSpec pipelining cannot skip DMAs.
    out2d = pl.pallas_call(
        _drop_path_kernel,
        out_shape=jax.ShapeDtypeStruct((rows, F_eff), x2d.dtype),
        grid=grid,
        in_specs=[
            pl.BlockSpec((TR, 1), lambda i, j: (i, 0)),    # per-row scale
            pl.BlockSpec((TR, TF), lambda i, j: (i, j)),   # activation tile
        ],
        out_specs=pl.BlockSpec((TR, TF), lambda i, j: (i, j)),
        compiler_params=pltpu.CompilerParams(
            dimension_semantics=("parallel", "parallel"),
            vmem_limit_bytes=vmem_limit,
        ),
        input_output_aliases=({1: 0} if donate_x else {}),
    )(scale_rows, x2d)

    return out2d.reshape(x.shape)


class DropPath:
    """JAX/Pallas equivalent of the PyTorch DropPath module (no parameters)."""

    def __init__(self, drop_prob=None):
        self.drop_prob = drop_prob if drop_prob is not None else 0.0
        self.training = True

    def __call__(self, x, key=None):
        return drop_path(x, self.drop_prob, self.training, key=key)


if __name__ == "__main__":
    key = jax.random.PRNGKey(0)
    kx, kmask, kx2, kmask2 = jax.random.split(key, 4)

    # --- main check: NCHW f32 input, matching the PyTorch usage -------------
    B, C, H, W = 2, 4, 16, 16
    x = jax.random.normal(kx, (B, C, H, W), dtype=jnp.float32)

    module = DropPath(drop_prob=0.25)
    module.training = True

    out = jax.block_until_ready(module(x, key=kmask))
    assert out.shape == x.shape and out.dtype == x.dtype

    # Reference: recompute the same mask in plain JAX.
    keep_prob = 1.0 - module.drop_prob
    u = jax.random.uniform(kmask, (B, 1), dtype=jnp.float32)
    mask = jnp.floor(keep_prob + u).reshape(B, 1, 1, 1)
    ref = x / keep_prob * mask
    assert jnp.allclose(out, ref, atol=1e-6, rtol=1e-6)

    # --- bf16 + non-128-multiple feature count (ragged-lane + sublane fill) --
    B2 = 4
    x2 = jax.random.normal(kx2, (B2, 3, 10, 10), dtype=jnp.bfloat16)
    out2 = jax.block_until_ready(drop_path(x2, 0.25, True, key=kmask2))
    u2 = jax.random.uniform(kmask2, (B2, 1), dtype=jnp.float32)
    scale2 = (jnp.floor(keep_prob + u2) / keep_prob).reshape(B2, 1, 1, 1)
    ref2 = (x2.astype(jnp.float32) * scale2).astype(jnp.bfloat16)
    assert out2.shape == x2.shape and out2.dtype == x2.dtype
    assert jnp.allclose(out2.astype(jnp.float32), ref2.astype(jnp.float32),
                        atol=1e-2, rtol=1e-2)

    # --- eval / drop_prob=0 path is identity --------------------------------
    module.training = False
    out_eval = jax.block_until_ready(module(x))
    assert jnp.array_equal(out_eval, x)

    print("KERNEL_OK")
</pallas_src>

<mosaic_0001>
module attributes {stable_mosaic.version = 11 : i64} {
  func.func @_drop_path_kernel(%arg0: i32, %arg1: i32, %arg2: memref<8x1xf32, #tpu.memory_space<vmem>>, %arg3: memref<8x256xf32, #tpu.memory_space<vmem>>, %arg4: memref<8x256xf32, #tpu.memory_space<vmem>>) attributes {dimension_semantics = [#tpu.dimension_semantics<parallel>, #tpu.dimension_semantics<parallel>], iteration_bounds = array<i64: 1, 1>, scalar_prefetch = 0 : i64, scratch_operands = 0 : i64, tpu.core_type = #tpu.core_type<tc>, window_params = [{transform_indices = @transform_0, window_bounds = array<i64: 8, 1>}, {transform_indices = @transform_1, window_bounds = array<i64: 8, 256>}, {transform_indices = @transform_2, window_bounds = array<i64: 8, 256>}]} {
    %c0 = arith.constant 0 : index
    %c0_0 = arith.constant 0 : index
    %0 = vector.load %arg3[%c0, %c0_0] : memref<8x256xf32, #tpu.memory_space<vmem>>, vector<8x256xf32>
    %c0_1 = arith.constant 0 : index
    %c0_2 = arith.constant 0 : index
    %1 = vector.load %arg2[%c0_1, %c0_2] : memref<8x1xf32, #tpu.memory_space<vmem>>, vector<8x1xf32>
    %2 = vector.broadcast %1 : vector<8x1xf32> to vector<8x256xf32>
    %3 = arith.mulf %0, %2 : vector<8x256xf32>
    %c0_3 = arith.constant 0 : index
    %c0_4 = arith.constant 0 : index
    %4 = vector.load %arg4[%c0_3, %c0_4] : memref<8x256xf32, #tpu.memory_space<vmem>>, vector<8x256xf32>
    tpu.vector_store %arg4[%c0_3, %c0_4], %3 {strides = array<i32>} : memref<8x256xf32, #tpu.memory_space<vmem>>, vector<8x256xf32>,
    return
  }
  func.func @transform_0(%arg0: i32, %arg1: i32) -> (i32, i32) {
    %c0_i32 = arith.constant 0 : i32
    %c0_i32_0 = arith.constant 0 : i32
    return %arg0, %c0_i32 : i32, i32
  }
  func.func @transform_1(%arg0: i32, %arg1: i32) -> (i32, i32) {
    %c0_i32 = arith.constant 0 : i32
    return %arg0, %arg1 : i32, i32
  }
  func.func @transform_2(%arg0: i32, %arg1: i32) -> (i32, i32) {
    %c0_i32 = arith.constant 0 : i32
    return %arg0, %arg1 : i32, i32
  }
}

</mosaic_0001>

<llo_original>
// kernel: tpu_custom_call.1
$region0: #{tpu_custom_call.1}
  #allocation0 [shape = 'u32[]', space=smem, size = 0x4, offset = 0x4, fixed_abs, tag = 'smem constant byte address 0x4 - core index']
  #allocation1 [shape = 'u32[72,128]{1,0:T(1,128)}', space=vmem, size = 0x9000, scoped, tag = 'internal scratch']
  %s0 = inlined_call_operand.vmem [shape: f32[8,1], index: 0, kind: input, shape index: {}]
  %s1 = inlined_call_operand.hbm [shape: f32[8,256], index: 1, kind: input, shape index: {}]
  %s2 = inlined_call_operand.hbm [shape: f32[8,256], index: 2, kind: output, shape index: {}]
  %s3 = sld [smem:[#allocation0]]
  $region22: #{tpu_custom_call.1} parent=0
    _
  %s5 = ssub.s32 1, %s3
  %s6 = scalar_select 0, %s5, %s3
  $region1: #{tpu_custom_call.1} parent=0
    #allocation2 [shape = 'u8[8192]{0}', space=vmem, size = 0x2000, scoped, tag = 'input window, operand 1, single buffered']
    #allocation3 [shape = 's32[1]{0}', space=sflag, size = 0x4, scoped, tag = 'scoped memory for tpu_custom_call.1']
    #allocation4 [shape = 's32[1]{0}', space=sflag, size = 0x4, scoped, tag = 'scoped memory for tpu_custom_call.1']
    #allocation5 [shape = 'u8[8192]{0}', space=vmem, size = 0x2000, scoped, tag = 'output window, operand 0, single buffered']
    %7 = vsyncpa [#allocation3], 0
    %8 = vsyncpa [#allocation4], 0
    // Predicated region
    $region2: #{tpu_custom_call.1} parent=1 // pred_check
      _
    $region3: #{tpu_custom_call.1} parent=1 // pred_check_branch
      %10 = sbr.rel (0) target = $region5
    $region4: #{tpu_custom_call.1} parent=1 // pred_region
      _
    $region5: #{tpu_custom_call.1} parent=1 // pred_fallthru
      _
    // Predicated region
    $region6: #{tpu_custom_call.1} parent=1 // pred_check
      _
    $region7: #{tpu_custom_call.1} parent=1 // pred_check_branch
      %12 = sbr.rel (0) target = $region9
    $region8: #{tpu_custom_call.1} parent=1 // pred_region
      %14 = vsyncadd [#allocation3], 0
      %s16 = sshll.u32 %s1, 4
      %s17 = int_to_ptr.hbm [resolvable:$true] %s16
      %s18 = sshll.u32 [#allocation2], 4
      %s19 = int_to_ptr.vmem [resolvable:$true] %s18
      %21 = dma.hbm_to_vmem [thread:$0]  %s17, 256, %s19, [#allocation3]
    $region9: #{tpu_custom_call.1} parent=1 // pred_fallthru
      _
    // Predicated region
    $region10: #{tpu_custom_call.1} parent=1 // pred_check
      _
    $region11: #{tpu_custom_call.1} parent=1 // pred_check_branch
      %23 = sbr.rel (0) target = $region13
    $region12: #{tpu_custom_call.1} parent=1 // pred_region
      %25 = dma.done [#allocation3], 256
    $region13: #{tpu_custom_call.1} parent=1 // pred_fallthru
      _
    %v26 = vld [vmem:[#allocation2] sm:$0xff]
    %v27 = vld [vmem:[#allocation2 + $0x8] sm:$0xff]
    %v28 = vld [vmem:[%s0] sm:$0xff]
    %30 = vset.pattern.permute.xlu0 0
    %31 = vperm.xlu0 %30, %v28
    %v32 = vpop.permute.xlu0 %31
    %v34 = vmul.f32 %v26, %v32
    %v35 = vmul.f32 %v27, %v32
    %36 = vst [vmem:[#allocation5] sm:$0xff] %v34
    %37 = vst [vmem:[#allocation5 + $0x8] sm:$0xff] %v35
    // Predicated region
    $region14: #{tpu_custom_call.1} parent=1 // pred_check
      _
    $region15: #{tpu_custom_call.1} parent=1 // pred_check_branch
      %39 = sbr.rel (0) target = $region17
    $region16: #{tpu_custom_call.1} parent=1 // pred_region
      %41 = vsyncadd [#allocation4], 0
      %s43 = sshll.u32 [#allocation5], 4
      %s44 = int_to_ptr.vmem [resolvable:$true] %s43
      %s45 = sshll.u32 %s2, 4
      %s46 = int_to_ptr.hbm [resolvable:$true] %s45
      %48 = dma.vmem_to_hbm [thread:$0]  %s44, 256, %s46, [#allocation4]
    $region17: #{tpu_custom_call.1} parent=1 // pred_fallthru
      _
    // Predicated region
    $region18: #{tpu_custom_call.1} parent=1 // pred_check
      _
    $region19: #{tpu_custom_call.1} parent=1 // pred_check_branch
      %50 = sbr.rel (0) target = $region21
    $region20: #{tpu_custom_call.1} parent=1 // pred_region
      %52 = dma.done [#allocation4], 256
    $region21: #{tpu_custom_call.1} parent=1 // pred_fallthru
      _
    %53 = vsyncpa [#allocation3], 1
    %54 = vsyncpa [#allocation4], 1

</llo_original>
